<compile_context>
chip_gen: v5e
topology: v5e:2x2
jax: 0.10.0
libtpu: 0.0.40
codegen_flags: <defaults>
</compile_context>

<pallas_src>
import math
import functools

import jax
import jax.numpy as jnp
from jax.experimental import pallas as pl
from jax.experimental.pallas import tpu as pltpu

# ----------------------------- config (small) --------------------------------
B = 2           # batch
S = 8           # sequence length
D_MODEL = 32    # d_model
N_HEADS = 4     # num_heads
D_KV = 8        # d_kv
INNER = N_HEADS * D_KV
EPS = 1e-6      # layer_norm_epsilon
NUM_BUCKETS = 32
MAX_DISTANCE = 128
# TODO(synk): dropout (config.dropout_rate) is identity in eval mode; training-mode
#             dropout is not implemented in the kernel.


# ----------------------------- Pallas kernel ---------------------------------
def t5_self_attn_kernel(x_ref, lnw_ref, wqkv_ref, wo_ref, bias_ref, o_ref,
                        *, n_heads, d_kv):
    """Single invocation.  x is (B*S, D); wqkv is (D, 3*INNER); bias is
    (H*B*S, H*B*S) with relative-position bias, optional attention mask, and
    -1e9 on all cross-(head,batch) blocks already folded in by the wrapper."""
    bs = x_ref.shape[0]                                   # B*S rows
    inner = n_heads * d_kv
    x = x_ref[...]                                        # (B*S, D)

    # --- T5LayerNorm (RMS norm, no bias, no mean subtraction) ---
    var = jnp.mean(x * x, axis=-1, keepdims=True)         # (B*S, 1)
    norm = x * jax.lax.rsqrt(var + EPS) * lnw_ref[...]    # (B*S, D) * (1, D)

    # --- ONE fused q/k/v projection (no bias, no 1/sqrt(d_k) scaling) ---
    qkv = jnp.dot(norm, wqkv_ref[...],
                  preferred_element_type=jnp.float32)     # (B*S, 3*INNER)

    # --- one-time head-major relayout: (B*S, INNER) -> (H*B*S, D_KV) ---
    # Lane extraction is paid once here (XLU slot has slack); all later
    # per-head accesses are sublane views.
    def head_major(t):
        return jnp.concatenate(
            [t[:, h * d_kv:(h + 1) * d_kv] for h in range(n_heads)], axis=0)

    q_hm = head_major(qkv[:, 0 * inner:1 * inner])        # (H*B*S, D_KV)
    k_hm = head_major(qkv[:, 1 * inner:2 * inner])
    v_hm = head_major(qkv[:, 2 * inner:3 * inner])

    # --- ONE score matmul for all heads (last-dim contraction, no transpose).
    # Cross-(head,batch) blocks get -1e9 from the bias slab and vanish after
    # softmax (exp underflows to exactly 0 in f32).
    dn = (((1,), (1,)), ((), ()))
    scores = jax.lax.dot_general(q_hm, k_hm, dimension_numbers=dn,
                                 preferred_element_type=jnp.float32)  # (H*B*S, H*B*S)
    scores = scores + bias_ref[...]                       # one VPU add

    # --- one numerically-stable softmax pass over every (head, batch) row ---
    m = jnp.max(scores, axis=-1, keepdims=True)
    p = jnp.exp(scores - m)
    attn = p * pl.reciprocal(jnp.sum(p, axis=-1, keepdims=True), approx=False)

    # --- ONE context matmul for all heads ---
    ctx_hm = jnp.dot(attn, v_hm,
                     preferred_element_type=jnp.float32)  # (H*B*S, D_KV)

    # --- lane-stack the per-head contexts (sublane views -> 8-lane offsets,
    #     XLU slack), then ONE output projection + residual ---
    ctx = jnp.concatenate(
        [ctx_hm[h * bs:(h + 1) * bs, :] for h in range(n_heads)], axis=1)  # (B*S, INNER)
    y = jnp.dot(ctx, wo_ref[...], preferred_element_type=jnp.float32)      # (B*S, D)
    o_ref[...] = x + y


def t5_layer_self_attention(hidden_states, ln_weight, wq, wk, wv, wo,
                            position_bias, attention_mask=None):
    """hidden_states: (B, S, D) f32.  Linear weights pre-transposed to (in, out).
    position_bias: (1, H, S, S).  attention_mask (optional): additive mask
    broadcastable to (B, H, S, S) (HF-style 0 / large-negative / -inf)."""
    Bx, Sx, Dx = hidden_states.shape
    n_heads = position_bias.shape[1]
    inner = wq.shape[1]
    d_kv = inner // n_heads
    bs = Bx * Sx

    # Free (row-major) reshapes / weight fusion in the wrapper.
    x2d = hidden_states.reshape(bs, Dx)
    ln2d = ln_weight.reshape(1, Dx)
    w_qkv = jnp.concatenate([wq, wk, wv], axis=1)          # (D, 3*INNER)

    # Fold relative-position bias (+ optional attention mask) and the -1e9
    # cross-(head,batch) mask into one (H*B*S, H*B*S) additive slab.  Row and
    # column order is (h, b, i) — matching the kernel's head-major row folding.
    # jnp.where keeps the fold robust to -inf attention masks.
    pb = jnp.broadcast_to(position_bias, (Bx, n_heads, Sx, Sx)).astype(jnp.float32)
    if attention_mask is not None:
        pb = pb + jnp.broadcast_to(attention_mask,
                                   (Bx, n_heads, Sx, Sx)).astype(jnp.float32)
    valid = jnp.transpose(pb, (1, 0, 2, 3))                # (H, B, S, S)
    blk = (jnp.eye(n_heads, dtype=bool)[:, None, None, :, None, None]
           & jnp.eye(Bx, dtype=bool)[None, :, None, None, :, None])   # (H,B,1,H,B,1)
    big = jnp.where(blk, valid[:, :, :, None, None, :],
                    jnp.float32(-1e9))                     # (H,B,S,H,B,S)
    bias2d = big.reshape(n_heads * bs, n_heads * bs)

    vmem = pltpu.MemorySpace.VMEM
    out2d = pl.pallas_call(
        functools.partial(t5_self_attn_kernel, n_heads=n_heads, d_kv=d_kv),
        out_shape=jax.ShapeDtypeStruct((bs, Dx), jnp.float32),
        in_specs=[pl.BlockSpec(memory_space=vmem)] * 5,
        out_specs=pl.BlockSpec(memory_space=vmem),
    )(x2d, ln2d, w_qkv, wo, bias2d)
    # TODO(synk): at real T5 shapes (S>=512, D>=768) this whole-slab, gridless,
    #             single-TensorCore design must become a tiled flash-style
    #             pipeline: per-(q-block, k-block) tile-local bias (no quadratic
    #             precomputed slab), a "parallel" grid axis for v7x's two
    #             TensorCores, explicit vmem_limit_bytes for the per-generation
    #             VMEM (64 MiB v7x vs 128 MiB v5e/v6e), bf16 MXU operands with
    #             f32 accumulation, and batching of multiple sequences/layers so
    #             the row dimension reaches >=128/256 for decent MXU fill.
    return out2d.reshape(Bx, Sx, Dx)


# -------------------- relative position bias (JAX glue) ----------------------
def _relative_position_bucket(rel_pos, num_buckets=NUM_BUCKETS,
                              max_distance=MAX_DISTANCE, bidirectional=True):
    ret = jnp.zeros_like(rel_pos)
    n = -rel_pos
    if bidirectional:
        num_buckets //= 2
        ret = ret + (n < 0).astype(jnp.int32) * num_buckets
        n = jnp.abs(n)
    else:
        n = jnp.maximum(n, 0)
    max_exact = num_buckets // 2
    is_small = n < max_exact
    n_safe = jnp.maximum(n, 1).astype(jnp.float32)
    val_if_large = max_exact + (
        jnp.log(n_safe / max_exact) / math.log(max_distance / max_exact)
        * (num_buckets - max_exact)
    ).astype(jnp.int32)
    val_if_large = jnp.minimum(val_if_large, num_buckets - 1)
    return ret + jnp.where(is_small, n, val_if_large)


def compute_position_bias(rel_attn_bias_table, qlen, klen):
    """rel_attn_bias_table: (NUM_BUCKETS, N_HEADS) -> (1, H, qlen, klen)."""
    ctx_pos = jnp.arange(qlen, dtype=jnp.int32)[:, None]
    mem_pos = jnp.arange(klen, dtype=jnp.int32)[None, :]
    rel_pos = mem_pos - ctx_pos
    buckets = _relative_position_bucket(rel_pos)                  # (q, k)
    values = rel_attn_bias_table[buckets]                         # (q, k, H)
    return jnp.transpose(values, (2, 0, 1))[None, :, :, :]        # (1, H, q, k)


# ------------------------------ pure-JAX reference ---------------------------
def reference(x, ln_w, wq, wk, wv, wo, pos_bias):
    var = jnp.mean(x * x, axis=-1, keepdims=True)
    norm = x * jax.lax.rsqrt(var + EPS) * ln_w
    def split(t):  # (B, S, INNER) -> (B, H, S, D_KV)
        return jnp.transpose(t.reshape(B, S, N_HEADS, D_KV), (0, 2, 1, 3))
    q, k, v = split(norm @ wq), split(norm @ wk), split(norm @ wv)
    scores = jnp.einsum('bhqd,bhkd->bhqk', q, k) + pos_bias
    attn = jax.nn.softmax(scores, axis=-1)
    ctx = jnp.einsum('bhqk,bhkd->bhqd', attn, v)
    ctx = jnp.transpose(ctx, (0, 2, 1, 3)).reshape(B, S, INNER)
    return x + ctx @ wo


# ----------------------------------- main -------------------------------------
if __name__ == "__main__":
    key = jax.random.PRNGKey(0)
    k_x, k_ln, k_q, k_k, k_v, k_o, k_b = jax.random.split(key, 7)

    hidden_states = jax.random.normal(k_x, (B, S, D_MODEL), dtype=jnp.float32)
    ln_weight = 1.0 + 0.1 * jax.random.normal(k_ln, (D_MODEL,), dtype=jnp.float32)
    # (in, out) layout == PyTorch nn.Linear weight (out, in) transposed.
    wq = jax.random.normal(k_q, (D_MODEL, INNER), dtype=jnp.float32) * 0.05
    wk = jax.random.normal(k_k, (D_MODEL, INNER), dtype=jnp.float32) * 0.05
    wv = jax.random.normal(k_v, (D_MODEL, INNER), dtype=jnp.float32) * 0.05
    wo = jax.random.normal(k_o, (INNER, D_MODEL), dtype=jnp.float32) * 0.05
    rel_bias_table = jax.random.normal(k_b, (NUM_BUCKETS, N_HEADS),
                                       dtype=jnp.float32) * 0.1

    pos_bias = compute_position_bias(rel_bias_table, S, S)   # (1, H, S, S)
    # attention_mask=None in this example; a provided HF-style additive mask
    # would be folded into the bias slab inside t5_layer_self_attention.

    out = t5_layer_self_attention(hidden_states, ln_weight, wq, wk, wv, wo, pos_bias)
    out = jax.block_until_ready(out)

    ref = reference(hidden_states, ln_weight, wq, wk, wv, wo, pos_bias)
    assert out.shape == (B, S, D_MODEL)
    assert jnp.allclose(out, ref, rtol=1e-4, atol=1e-4), "mismatch vs reference"

    print("KERNEL_OK")
</pallas_src>

<mosaic_0001>
module attributes {stable_mosaic.version = 11 : i64} {
  func.func @t5_self_attn_kernel(%arg0: memref<16x32xf32, #tpu.memory_space<vmem>>, %arg1: memref<1x32xf32, #tpu.memory_space<vmem>>, %arg2: memref<32x96xf32, #tpu.memory_space<vmem>>, %arg3: memref<32x32xf32, #tpu.memory_space<vmem>>, %arg4: memref<64x64xf32, #tpu.memory_space<vmem>>, %arg5: memref<16x32xf32, #tpu.memory_space<vmem>>) attributes {dimension_semantics = [], scalar_prefetch = 0 : i64, scratch_operands = 0 : i64, tpu.core_type = #tpu.core_type<tc>} {
    %c0 = arith.constant 0 : index
    %c0_0 = arith.constant 0 : index
    %0 = vector.load %arg0[%c0, %c0_0] : memref<16x32xf32, #tpu.memory_space<vmem>>, vector<16x32xf32>
    %1 = arith.mulf %0, %0 : vector<16x32xf32>
    %cst = arith.constant dense<0.000000e+00> : vector<16xf32>
    %2 = vector.multi_reduction <add>, %1, %cst [1] : vector<16x32xf32> to vector<16xf32>
    %3 = vector.shape_cast %2 : vector<16xf32> to vector<16x1xf32>
    %cst_1 = arith.constant 3.200000e+01 : f32
    %4 = vector.broadcast %cst_1 : f32 to vector<16x1xf32>
    %5 = arith.divf %3, %4 : vector<16x1xf32>
    %cst_2 = arith.constant 9.99999997E-7 : f32
    %6 = vector.broadcast %cst_2 : f32 to vector<16x1xf32>
    %7 = arith.addf %5, %6 : vector<16x1xf32>
    %8 = math.rsqrt %7 : vector<16x1xf32>
    %9 = vector.broadcast %8 : vector<16x1xf32> to vector<16x32xf32>
    %10 = arith.mulf %0, %9 : vector<16x32xf32>
    %c0_3 = arith.constant 0 : index
    %c0_4 = arith.constant 0 : index
    %11 = vector.load %arg1[%c0_3, %c0_4] : memref<1x32xf32, #tpu.memory_space<vmem>>, vector<1x32xf32>
    %12 = vector.broadcast %11 : vector<1x32xf32> to vector<16x32xf32>
    %13 = arith.mulf %10, %12 : vector<16x32xf32>
    %c0_5 = arith.constant 0 : index
    %c0_6 = arith.constant 0 : index
    %14 = vector.load %arg2[%c0_5, %c0_6] : memref<32x96xf32, #tpu.memory_space<vmem>>, vector<32x96xf32>
    %cst_7 = arith.constant dense<0.000000e+00> : vector<16x96xf32>
    %15 = tpu.matmul %13, %14, %cst_7 {dimension_numbers = #tpu.dot_dimension_numbers<[1], [0], [0], [1], [0, 0, 1, 1], [], []>} : vector<16x32xf32>, vector<32x96xf32>, vector<16x96xf32> -> vector<16x96xf32>
    %16 = vector.extract_strided_slice %15 {offsets = [0, 0], sizes = [16, 32], strides = [1, 1]} : vector<16x96xf32> to vector<16x32xf32>
    %17 = vector.extract_strided_slice %16 {offsets = [0, 0], sizes = [16, 8], strides = [1, 1]} : vector<16x32xf32> to vector<16x8xf32>
    %18 = vector.extract_strided_slice %16 {offsets = [0, 8], sizes = [16, 8], strides = [1, 1]} : vector<16x32xf32> to vector<16x8xf32>
    %19 = vector.extract_strided_slice %16 {offsets = [0, 16], sizes = [16, 8], strides = [1, 1]} : vector<16x32xf32> to vector<16x8xf32>
    %20 = vector.extract_strided_slice %16 {offsets = [0, 24], sizes = [16, 8], strides = [1, 1]} : vector<16x32xf32> to vector<16x8xf32>
    %21 = tpu.concatenate %17, %18, %19, %20 in 0 : vector<16x8xf32>, vector<16x8xf32>, vector<16x8xf32>, vector<16x8xf32> -> vector<64x8xf32>
    %22 = vector.extract_strided_slice %15 {offsets = [0, 32], sizes = [16, 32], strides = [1, 1]} : vector<16x96xf32> to vector<16x32xf32>
    %23 = vector.extract_strided_slice %22 {offsets = [0, 0], sizes = [16, 8], strides = [1, 1]} : vector<16x32xf32> to vector<16x8xf32>
    %24 = vector.extract_strided_slice %22 {offsets = [0, 8], sizes = [16, 8], strides = [1, 1]} : vector<16x32xf32> to vector<16x8xf32>
    %25 = vector.extract_strided_slice %22 {offsets = [0, 16], sizes = [16, 8], strides = [1, 1]} : vector<16x32xf32> to vector<16x8xf32>
    %26 = vector.extract_strided_slice %22 {offsets = [0, 24], sizes = [16, 8], strides = [1, 1]} : vector<16x32xf32> to vector<16x8xf32>
    %27 = tpu.concatenate %23, %24, %25, %26 in 0 : vector<16x8xf32>, vector<16x8xf32>, vector<16x8xf32>, vector<16x8xf32> -> vector<64x8xf32>
    %28 = vector.extract_strided_slice %15 {offsets = [0, 64], sizes = [16, 32], strides = [1, 1]} : vector<16x96xf32> to vector<16x32xf32>
    %29 = vector.extract_strided_slice %28 {offsets = [0, 0], sizes = [16, 8], strides = [1, 1]} : vector<16x32xf32> to vector<16x8xf32>
    %30 = vector.extract_strided_slice %28 {offsets = [0, 8], sizes = [16, 8], strides = [1, 1]} : vector<16x32xf32> to vector<16x8xf32>
    %31 = vector.extract_strided_slice %28 {offsets = [0, 16], sizes = [16, 8], strides = [1, 1]} : vector<16x32xf32> to vector<16x8xf32>
    %32 = vector.extract_strided_slice %28 {offsets = [0, 24], sizes = [16, 8], strides = [1, 1]} : vector<16x32xf32> to vector<16x8xf32>
    %33 = tpu.concatenate %29, %30, %31, %32 in 0 : vector<16x8xf32>, vector<16x8xf32>, vector<16x8xf32>, vector<16x8xf32> -> vector<64x8xf32>
    %cst_8 = arith.constant dense<0.000000e+00> : vector<64x64xf32>
    %34 = tpu.matmul %21, %27, %cst_8 {dimension_numbers = #tpu.dot_dimension_numbers<[1], [1], [0], [0], [0, 0, 1, 0], [], []>} : vector<64x8xf32>, vector<64x8xf32>, vector<64x64xf32> -> vector<64x64xf32>
    %c0_9 = arith.constant 0 : index
    %c0_10 = arith.constant 0 : index
    %35 = vector.load %arg4[%c0_9, %c0_10] : memref<64x64xf32, #tpu.memory_space<vmem>>, vector<64x64xf32>
    %36 = arith.addf %34, %35 : vector<64x64xf32>
    %cst_11 = arith.constant dense<0xFF800000> : vector<64xf32>
    %37 = vector.multi_reduction <maximumf>, %36, %cst_11 [1] : vector<64x64xf32> to vector<64xf32>
    %38 = vector.shape_cast %37 : vector<64xf32> to vector<64x1xf32>
    %39 = vector.broadcast %38 : vector<64x1xf32> to vector<64x64xf32>
    %40 = arith.subf %36, %39 : vector<64x64xf32>
    %41 = math.exp %40 : vector<64x64xf32>
    %cst_12 = arith.constant dense<0.000000e+00> : vector<64xf32>
    %42 = vector.multi_reduction <add>, %41, %cst_12 [1] : vector<64x64xf32> to vector<64xf32>
    %43 = vector.shape_cast %42 : vector<64xf32> to vector<64x1xf32>
    %44 = tpu.reciprocal %43 : vector<64x1xf32> -> vector<64x1xf32>
    %45 = vector.broadcast %44 : vector<64x1xf32> to vector<64x64xf32>
    %46 = arith.mulf %41, %45 : vector<64x64xf32>
    %cst_13 = arith.constant dense<0.000000e+00> : vector<64x8xf32>
    %47 = tpu.matmul %46, %33, %cst_13 {dimension_numbers = #tpu.dot_dimension_numbers<[1], [0], [0], [1], [0, 0, 1, 1], [], []>} : vector<64x64xf32>, vector<64x8xf32>, vector<64x8xf32> -> vector<64x8xf32>
    %48 = vector.extract_strided_slice %47 {offsets = [0, 0], sizes = [16, 8], strides = [1, 1]} : vector<64x8xf32> to vector<16x8xf32>
    %49 = vector.extract_strided_slice %47 {offsets = [16, 0], sizes = [16, 8], strides = [1, 1]} : vector<64x8xf32> to vector<16x8xf32>
    %50 = vector.extract_strided_slice %47 {offsets = [32, 0], sizes = [16, 8], strides = [1, 1]} : vector<64x8xf32> to vector<16x8xf32>
    %51 = vector.extract_strided_slice %47 {offsets = [48, 0], sizes = [16, 8], strides = [1, 1]} : vector<64x8xf32> to vector<16x8xf32>
    %52 = tpu.concatenate %48, %49, %50, %51 in 1 : vector<16x8xf32>, vector<16x8xf32>, vector<16x8xf32>, vector<16x8xf32> -> vector<16x32xf32>
    %c0_14 = arith.constant 0 : index
    %c0_15 = arith.constant 0 : index
    %53 = vector.load %arg3[%c0_14, %c0_15] : memref<32x32xf32, #tpu.memory_space<vmem>>, vector<32x32xf32>
    %cst_16 = arith.constant dense<0.000000e+00> : vector<16x32xf32>
    %54 = tpu.matmul %52, %53, %cst_16 {dimension_numbers = #tpu.dot_dimension_numbers<[1], [0], [0], [1], [0, 0, 1, 1], [], []>} : vector<16x32xf32>, vector<32x32xf32>, vector<16x32xf32> -> vector<16x32xf32>
    %55 = arith.addf %0, %54 : vector<16x32xf32>
    %c0_17 = arith.constant 0 : index
    %c0_18 = arith.constant 0 : index
    %56 = vector.load %arg5[%c0_17, %c0_18] : memref<16x32xf32, #tpu.memory_space<vmem>>, vector<16x32xf32>
    tpu.vector_store %arg5[%c0_17, %c0_18], %55 {strides = array<i32>} : memref<16x32xf32, #tpu.memory_space<vmem>>, vector<16x32xf32>,
    return
  }
}

</mosaic_0001>

<llo_original>
// kernel: tpu_custom_call.1
$region0: #{tpu_custom_call.1}
  #allocation0 [shape = 'u32[]', space=smem, size = 0x4, offset = 0x4, fixed_abs, tag = 'smem constant byte address 0x4 - core index']
  #allocation1 [shape = 'u32[72,128]{1,0:T(1,128)}', space=vmem, size = 0x9000, scoped, tag = 'internal scratch']
  %s0 = inlined_call_operand.hbm [shape: f32[16,32], index: 0, kind: input, shape index: {}]
  %s1 = inlined_call_operand.hbm [shape: f32[1,32], index: 1, kind: input, shape index: {}]
  %s2 = inlined_call_operand.hbm [shape: f32[32,96], index: 2, kind: input, shape index: {}]
  %s3 = inlined_call_operand.hbm [shape: f32[32,32], index: 3, kind: input, shape index: {}]
  %s4 = inlined_call_operand.hbm [shape: f32[64,64], index: 4, kind: input, shape index: {}]
  %s5 = inlined_call_operand.hbm [shape: f32[16,32], index: 5, kind: output, shape index: {}]
  %s6 = sld [smem:[#allocation0]]
  $region50: #{tpu_custom_call.1} parent=0
    _
  %s8 = ssub.s32 1, %s6
  %s9 = scalar_select 0, %s8, %s6
  $region1: #{tpu_custom_call.1} parent=0
    #allocation2 [shape = 'u8[8192]{0}', space=vmem, size = 0x2000, scoped, tag = 'input window, operand 0, single buffered']
    #allocation3 [shape = 's32[1]{0}', space=sflag, size = 0x4, scoped, tag = 'scoped memory for tpu_custom_call.1']
    #allocation4 [shape = 's32[1]{0}', space=sflag, size = 0x4, scoped, tag = 'scoped memory for tpu_custom_call.1']
    #allocation5 [shape = 'u8[512]{0}', space=vmem, size = 0x400, scoped, tag = 'input window, operand 1, single buffered']
    #allocation6 [shape = 's32[1]{0}', space=sflag, size = 0x4, scoped, tag = 'scoped memory for tpu_custom_call.1']
    #allocation7 [shape = 'u8[16384]{0}', space=vmem, size = 0x4000, scoped, tag = 'input window, operand 2, single buffered']
    #allocation8 [shape = 'u8[16384]{0}', space=vmem, size = 0x4000, scoped, tag = 'input window, operand 3, single buffered']
    #allocation9 [shape = 's32[1]{0}', space=sflag, size = 0x4, scoped, tag = 'scoped memory for tpu_custom_call.1']
    #allocation10 [shape = 'u8[32768]{0}', space=vmem, size = 0x8000, scoped, tag = 'input window, operand 4, single buffered']
    #allocation11 [shape = 'u8[8192]{0}', space=vmem, size = 0x2000, scoped, tag = 'output window, operand 0, single buffered']
    %10 = vsyncpa [#allocation3], 0
    %11 = vsyncpa [#allocation6], 0
    %12 = vsyncpa [#allocation9], 0
    %13 = vsyncpa [#allocation4], 0
    // Predicated region
    $region2: #{tpu_custom_call.1} parent=1 // pred_check
      _
    $region3: #{tpu_custom_call.1} parent=1 // pred_check_branch
      %15 = sbr.rel (0) target = $region5
    $region4: #{tpu_custom_call.1} parent=1 // pred_region
      %17 = vsyncadd [#allocation3], 0
      %s18 = sshll.u32 %s0, 4
      %s19 = int_to_ptr.hbm [resolvable:$true] %s18
      %s20 = sshll.u32 [#allocation2], 4
      %s21 = int_to_ptr.vmem [resolvable:$true] %s20
      %26 = dma.hbm_to_vmem [thread:$0]  %s19, 256, %s21, [#allocation3], 128, 128, 8
    $region5: #{tpu_custom_call.1} parent=1 // pred_fallthru
      _
    // Predicated region
    $region6: #{tpu_custom_call.1} parent=1 // pred_check
      _
    $region7: #{tpu_custom_call.1} parent=1 // pred_check_branch
      %28 = sbr.rel (0) target = $region9
    $region8: #{tpu_custom_call.1} parent=1 // pred_region
      %30 = vsyncadd [#allocation6], 0
      %s32 = sshll.u32 %s1, 4
      %s33 = int_to_ptr.hbm [resolvable:$true] %s32
      %s34 = sshll.u32 [#allocation5], 4
      %s35 = int_to_ptr.vmem [resolvable:$true] %s34
      %37 = dma.hbm_to_vmem [thread:$0]  %s33, 16, %s35, [#allocation6]
    $region9: #{tpu_custom_call.1} parent=1 // pred_fallthru
      _
    // Predicated region
    $region10: #{tpu_custom_call.1} parent=1 // pred_check
      _
    $region11: #{tpu_custom_call.1} parent=1 // pred_check_branch
      %39 = sbr.rel (0) target = $region13
    $region12: #{tpu_custom_call.1} parent=1 // pred_region
      %41 = vsyncadd [#allocation6], 0
      %s42 = sshll.u32 %s2, 4
      %s43 = int_to_ptr.hbm [resolvable:$true] %s42
      %s44 = sshll.u32 [#allocation7], 4
      %s45 = int_to_ptr.vmem [resolvable:$true] %s44
      %50 = dma.hbm_to_vmem [thread:$0]  %s43, 512, %s45, [#allocation6], 128, 128, 8
    $region13: #{tpu_custom_call.1} parent=1 // pred_fallthru
      _
    // Predicated region
    $region14: #{tpu_custom_call.1} parent=1 // pred_check
      _
    $region15: #{tpu_custom_call.1} parent=1 // pred_check_branch
      %52 = sbr.rel (0) target = $region17
    $region16: #{tpu_custom_call.1} parent=1 // pred_region
      %54 = vsyncadd [#allocation9], 0
      %s55 = sshll.u32 %s3, 4
      %s56 = int_to_ptr.hbm [resolvable:$true] %s55
      %s57 = sshll.u32 [#allocation8], 4
      %s58 = int_to_ptr.vmem [resolvable:$true] %s57
      %63 = dma.hbm_to_vmem [thread:$0]  %s56, 512, %s58, [#allocation9], 128, 128, 8
    $region17: #{tpu_custom_call.1} parent=1 // pred_fallthru
      _
    // Predicated region
    $region18: #{tpu_custom_call.1} parent=1 // pred_check
      _
    $region19: #{tpu_custom_call.1} parent=1 // pred_check_branch
      %65 = sbr.rel (0) target = $region21
    $region20: #{tpu_custom_call.1} parent=1 // pred_region
      %67 = vsyncadd [#allocation9], 0
      %s68 = sshll.u32 %s4, 4
      %s69 = int_to_ptr.hbm [resolvable:$true] %s68
      %s70 = sshll.u32 [#allocation10], 4
      %s71 = int_to_ptr.vmem [resolvable:$true] %s70
      %76 = dma.hbm_to_vmem [thread:$0]  %s69, 1024, %s71, [#allocation9], 128, 128, 8
    $region21: #{tpu_custom_call.1} parent=1 // pred_fallthru
      _
    // Predicated region
    $region22: #{tpu_custom_call.1} parent=1 // pred_check
      _
    $region23: #{tpu_custom_call.1} parent=1 // pred_check_branch
      %78 = sbr.rel (0) target = $region25
    $region24: #{tpu_custom_call.1} parent=1 // pred_region
      %80 = dma.done [#allocation3], 256
    $region25: #{tpu_custom_call.1} parent=1 // pred_fallthru
      _
    // Predicated region
    $region26: #{tpu_custom_call.1} parent=1 // pred_check
      _
    $region27: #{tpu_custom_call.1} parent=1 // pred_check_branch
      %82 = sbr.rel (0) target = $region29
    $region28: #{tpu_custom_call.1} parent=1 // pred_region
      %84 = dma.done [#allocation6], 16
    $region29: #{tpu_custom_call.1} parent=1 // pred_fallthru
      _
    // Predicated region
    $region30: #{tpu_custom_call.1} parent=1 // pred_check
      _
    $region31: #{tpu_custom_call.1} parent=1 // pred_check_branch
      %86 = sbr.rel (0) target = $region33
    $region32: #{tpu_custom_call.1} parent=1 // pred_region
      %88 = dma.done [#allocation6], 512
    $region33: #{tpu_custom_call.1} parent=1 // pred_fallthru
      _
    // Predicated region
    $region34: #{tpu_custom_call.1} parent=1 // pred_check
      _
    $region35: #{tpu_custom_call.1} parent=1 // pred_check_branch
      %90 = sbr.rel (0) target = $region37
    $region36: #{tpu_custom_call.1} parent=1 // pred_region
      %92 = dma.done [#allocation9], 512
    $region37: #{tpu_custom_call.1} parent=1 // pred_fallthru
      _
    // Predicated region
    $region38: #{tpu_custom_call.1} parent=1 // pred_check
      _
    $region39: #{tpu_custom_call.1} parent=1 // pred_check_branch
      %94 = sbr.rel (0) target = $region41
    $region40: #{tpu_custom_call.1} parent=1 // pred_region
      %96 = dma.done [#allocation9], 1024
    $region41: #{tpu_custom_call.1} parent=1 // pred_fallthru
      _
    %v97 = vld [vmem:[#allocation2] sm:$0xff]
    %v98 = vld [vmem:[#allocation2 + $0x8] sm:$0xff]
    %v99 = vmul.f32 %v97, %v97
    %v100 = vmul.f32 %v98, %v98
    %vm101 = vcmask 261120
    %v102 = vsel %vm101, %v99, 0.0
    %103 = vadd.xlane.f32.xlu0 %v102
    %v104 = vpop.xlane.xlu0 %103
    %v105 = vsel %vm101, %v100, 0.0
    %106 = vadd.xlane.f32.xlu0 %v105
    %v107 = vpop.xlane.xlu0 %106
    %v108 = vrcp.pop 32.0
    %v109 = vmul.f32 32.0, %v108
    %v110 = vsub.f32 1.0, %v109
    %v111 = vmul.f32 %v108, %v110
    %v112 = vadd.f32 %v108, %v111
    %vm113 = vweird.f32 %v108
    %v114 = vsel %vm113, %v108, %v112
    %v115 = vmul.f32 %v104, %v114
    %v116 = vmul.f32 %v107, %v114
    %v117 = vadd.f32 %v115, 1e-06
    %v118 = vadd.f32 %v116, 1e-06
    %v119 = vrsqrt.pop %v117
    %v120 = vmul.f32 %v119, %v117
    %v121 = vmul.f32 %v120, %v119
    %v122 = vmul.f32 0.5, %v121
    %v123 = vsub.f32 1.5, %v122
    %v124 = vmul.f32 %v119, %v123
    %vm125 = vweird.f32 %v117
    %vm126 = vweird.f32 %v119
    %vm127 = vmor %vm125, %vm126
    %v128 = vsel %vm127, %v119, %v124
    %v129 = vrsqrt.pop %v118
    %v130 = vmul.f32 %v129, %v118
    %v131 = vmul.f32 %v130, %v129
    %v132 = vmul.f32 0.5, %v131
    %v133 = vsub.f32 1.5, %v132
    %v134 = vmul.f32 %v129, %v133
    %vm135 = vweird.f32 %v118
    %vm136 = vweird.f32 %v129
    %vm137 = vmor %vm135, %vm136
    %v138 = vsel %vm137, %v129, %v134
    %v139 = vmul.f32 %v97, %v128
    %v140 = vmul.f32 %v98, %v138
    %v141 = vld [vmem:[#allocation5] sm:$0x1]
    %v143 = vperm.slane %v141, 0
    %v145 = vmul.f32 %v139, %v143
    %v146 = vmul.f32 %v140, %v143
    %v147 = vld [vmem:[#allocation7] sm:$0xff]
    %v148 = vld [vmem:[#allocation7 + $0x8] sm:$0xff]
    %v149 = vld [vmem:[#allocation7 + $0x10] sm:$0xff]
    %v150 = vld [vmem:[#allocation7 + $0x18] sm:$0xff]
    %v152 = vsel %vm101, %v145, 0
    %v155 = vsel %vm101, %v146, 0
    %157 = vmatpush.msra.mxu0 0.0
    %158 = vmatpush.msra.mxu0 0.0
    %159 = vmatpush.msra.mxu0 0.0
    %160 = vmatpush.msra.mxu0 0.0
    %161 = vmatpush.msra.mxu0 0.0
    %162 = vmatpush.msra.mxu0 0.0
    %163 = vmatpush.msra.mxu0 0.0
    %164 = vmatpush.msra.mxu0 0.0
    %165 = vmatpush.msra.mxu0 0.0
    %166 = vmatpush.msra.mxu0 0.0
    %167 = vmatpush.msra.mxu0 0.0
    %168 = vmatpush.msra.mxu0 0.0
    %169 = vmatpush.msra.mxu0 %v150
    %170 = vmatpush.msra.mxu0 %v149
    %171 = vmatpush.msra.mxu0 %v148
    %172 = vmatpush.msra.mxu0 %v147
    %173 = vmatmul.f32.gmra.mxu0 %v152
    %v174 = vpop.f32.mrf.mxu0
    %v175 = vadd.f32 0.0, %v174
    %176 = vmatmul.f32.gmra.mxu0 %v155
    %v177 = vpop.f32.mrf.mxu0
    %v178 = vadd.f32 0.0, %v177
    %179 = vdwg.mxu0
    %182 = vrot.lane.b32.xlu0 %v175, 120
    %v183 = vpop.permute.xlu0 %182
    %184 = vrot.lane.b32.xlu0 %v178, 120
    %v185 = vpop.permute.xlu0 %184
    %186 = vrot.lane.b32.xlu0 %v175, 112
    %v187 = vpop.permute.xlu0 %186
    %188 = vrot.lane.b32.xlu0 %v178, 112
    %v189 = vpop.permute.xlu0 %188
    %190 = vrot.lane.b32.xlu0 %v175, 104
    %v191 = vpop.permute.xlu0 %190
    %192 = vrot.lane.b32.xlu0 %v178, 104
    %v193 = vpop.permute.xlu0 %192
    %v194 = vld [vmem:[#allocation10] sm:$0xff]
    %v195 = vld [vmem:[#allocation10 + $0x8] sm:$0xff]
    %v196 = vld [vmem:[#allocation10 + $0x10] sm:$0xff]
    %v197 = vld [vmem:[#allocation10 + $0x18] sm:$0xff]
    %v198 = vld [vmem:[#allocation10 + $0x20] sm:$0xff]
    %v199 = vld [vmem:[#allocation10 + $0x28] sm:$0xff]
    %v200 = vld [vmem:[#allocation10 + $0x30] sm:$0xff]
    %v201 = vld [vmem:[#allocation10 + $0x38] sm:$0xff]
    %202 = vrot.lane.b32.xlu0 %v175, 96
    %v203 = vpop.permute.xlu0 %202
    %204 = vrot.lane.b32.xlu0 %v178, 96
    %v205 = vpop.permute.xlu0 %204
    %206 = vrot.lane.b32.xlu0 %v183, 96
    %v207 = vpop.permute.xlu0 %206
    %208 = vrot.lane.b32.xlu0 %v185, 96
    %v209 = vpop.permute.xlu0 %208
    %210 = vrot.lane.b32.xlu0 %v187, 96
    %v211 = vpop.permute.xlu0 %210
    %212 = vrot.lane.b32.xlu0 %v189, 96
    %v213 = vpop.permute.xlu0 %212
    %214 = vrot.lane.b32.xlu0 %v191, 96
    %v215 = vpop.permute.xlu0 %214
    %216 = vrot.lane.b32.xlu0 %v193, 96
    %v217 = vpop.permute.xlu0 %216
    %vm218 = vcmask 64512
    %v219 = vsel %vm218, %v175, 0
    %v221 = vsel %vm218, %v178, 0
    %v223 = vsel %vm218, %v183, 0
    %v225 = vsel %vm218, %v185, 0
    %v227 = vsel %vm218, %v187, 0
    %v229 = vsel %vm218, %v189, 0
    %v231 = vsel %vm218, %v191, 0
    %v233 = vsel %vm218, %v193, 0
    %v235 = vsel %vm218, %v203, 0
    %v237 = vsel %vm218, %v205, 0
    %v239 = vsel %vm218, %v207, 0
    %v241 = vsel %vm218, %v209, 0
    %v243 = vsel %vm218, %v211, 0
    %v245 = vsel %vm218, %v213, 0
    %v247 = vsel %vm218, %v215, 0
    %v249 = vsel %vm218, %v217, 0
    %251 = vmatpush.xpose.msra.mxu0 0.0
    %252 = vmatpush.xpose.msra.mxu0 0.0
    %253 = vmatpush.xpose.msra.mxu0 0.0
    %254 = vmatpush.xpose.msra.mxu0 0.0
    %255 = vmatpush.xpose.msra.mxu0 0.0
    %256 = vmatpush.xpose.msra.mxu0 0.0
    %257 = vmatpush.xpose.msra.mxu0 0.0
    %258 = vmatpush.xpose.msra.mxu0 0.0
    %259 = vmatpush.xpose.msra.mxu0 %v249
    %260 = vmatpush.xpose.msra.mxu0 %v247
    %261 = vmatpush.xpose.msra.mxu0 %v245
    %262 = vmatpush.xpose.msra.mxu0 %v243
    %263 = vmatpush.xpose.msra.mxu0 %v241
    %264 = vmatpush.xpose.msra.mxu0 %v239
    %265 = vmatpush.xpose.msra.mxu0 %v237
    %266 = vmatpush.xpose.msra.mxu0 %v235
    %267 = vmatmul.f32.gmra.mxu0 %v219
    %v268 = vpop.f32.mrf.mxu0
    %v269 = vadd.f32 %v194, %v268
    %270 = vmatmul.f32.gmra.mxu0 %v221
    %v271 = vpop.f32.mrf.mxu0
    %v272 = vadd.f32 %v195, %v271
    %273 = vmatmul.f32.gmra.mxu0 %v223
    %v274 = vpop.f32.mrf.mxu0
    %v275 = vadd.f32 %v196, %v274
    %276 = vmatmul.f32.gmra.mxu0 %v225
    %v277 = vpop.f32.mrf.mxu0
    %v278 = vadd.f32 %v197, %v277
    %279 = vmatmul.f32.gmra.mxu0 %v227
    %v280 = vpop.f32.mrf.mxu0
    %v281 = vadd.f32 %v198, %v280
    %282 = vmatmul.f32.gmra.mxu0 %v229
    %v283 = vpop.f32.mrf.mxu0
    %v284 = vadd.f32 %v199, %v283
    %285 = vmatmul.f32.gmra.mxu0 %v231
    %v286 = vpop.f32.mrf.mxu0
    %v287 = vadd.f32 %v200, %v286
    %288 = vmatmul.f32.gmra.mxu0 %v233
    %v289 = vpop.f32.mrf.mxu0
    %v290 = vadd.f32 %v201, %v289
    %291 = vdwg.mxu0
    %vm292 = vcmask 523264
    %v293 = vsel %vm292, %v269, -inf
    %294 = vmax.xlane.f32.xlu0 %v293
    %v295 = vpop.xlane.xlu0 %294
    %v296 = vsel %vm292, %v272, -inf
    %297 = vmax.xlane.f32.xlu0 %v296
    %v298 = vpop.xlane.xlu0 %297
    %v299 = vsel %vm292, %v275, -inf
    %300 = vmax.xlane.f32.xlu0 %v299
    %v301 = vpop.xlane.xlu0 %300
    %v302 = vsel %vm292, %v278, -inf
    %303 = vmax.xlane.f32.xlu0 %v302
    %v304 = vpop.xlane.xlu0 %303
    %v305 = vsel %vm292, %v281, -inf
    %306 = vmax.xlane.f32.xlu0 %v305
    %v307 = vpop.xlane.xlu0 %306
    %v308 = vsel %vm292, %v284, -inf
    %309 = vmax.xlane.f32.xlu0 %v308
    %v310 = vpop.xlane.xlu0 %309
    %v311 = vsel %vm292, %v287, -inf
    %312 = vmax.xlane.f32.xlu0 %v311
    %v313 = vpop.xlane.xlu0 %312
    %v314 = vsel %vm292, %v290, -inf
    %315 = vmax.xlane.f32.xlu0 %v314
    %v316 = vpop.xlane.xlu0 %315
    %v317 = vsub.f32 %v269, %v295
    %v318 = vsub.f32 %v272, %v298
    %v319 = vsub.f32 %v275, %v301
    %v320 = vsub.f32 %v278, %v304
    %v321 = vsub.f32 %v281, %v307
    %v322 = vsub.f32 %v284, %v310
    %v323 = vsub.f32 %v287, %v313
    %v324 = vsub.f32 %v290, %v316
    %v325 = vmul.f32 %v317, 1.442695
    %v326 = vpow.pop %v325
    %v327 = vmul.f32 %v318, 1.442695
    %v328 = vpow.pop %v327
    %v329 = vmul.f32 %v319, 1.442695
    %v330 = vpow.pop %v329
    %v331 = vmul.f32 %v320, 1.442695
    %v332 = vpow.pop %v331
    %v333 = vmul.f32 %v321, 1.442695
    %v334 = vpow.pop %v333
    %v335 = vmul.f32 %v322, 1.442695
    %v336 = vpow.pop %v335
    %v337 = vmul.f32 %v323, 1.442695
    %v338 = vpow.pop %v337
    %v339 = vmul.f32 %v324, 1.442695
    %v340 = vpow.pop %v339
    %v341 = vsel %vm292, %v326, 0.0
    %342 = vadd.xlane.f32.xlu0 %v341
    %v343 = vpop.xlane.xlu0 %342
    %v344 = vsel %vm292, %v328, 0.0
    %345 = vadd.xlane.f32.xlu0 %v344
    %v346 = vpop.xlane.xlu0 %345
    %v347 = vsel %vm292, %v330, 0.0
    %348 = vadd.xlane.f32.xlu0 %v347
    %v349 = vpop.xlane.xlu0 %348
    %v350 = vsel %vm292, %v332, 0.0
    %351 = vadd.xlane.f32.xlu0 %v350
    %v352 = vpop.xlane.xlu0 %351
    %v353 = vsel %vm292, %v334, 0.0
    %354 = vadd.xlane.f32.xlu0 %v353
    %v355 = vpop.xlane.xlu0 %354
    %v356 = vsel %vm292, %v336, 0.0
    %357 = vadd.xlane.f32.xlu0 %v356
    %v358 = vpop.xlane.xlu0 %357
    %v359 = vsel %vm292, %v338, 0.0
    %360 = vadd.xlane.f32.xlu0 %v359
    %v361 = vpop.xlane.xlu0 %360
    %v362 = vsel %vm292, %v340, 0.0
    %363 = vadd.xlane.f32.xlu0 %v362
    %v364 = vpop.xlane.xlu0 %363
    %v365 = vrcp.pop %v343
    %v366 = vmul.f32 %v343, %v365
    %v367 = vsub.f32 1.0, %v366
    %v368 = vmul.f32 %v365, %v367
    %v369 = vadd.f32 %v365, %v368
    %vm370 = vweird.f32 %v343
    %vm371 = vweird.f32 %v365
    %vm372 = vmor %vm370, %vm371
    %v373 = vsel %vm372, %v365, %v369
    %v374 = vand.u32 2147483647, %v343
    %vm375 = vcmp.eq.f32.partialorder %v374, 8.507059e+37
    %v376 = vand.u32 %v343, 2147483648
    %v377 = vor.u32 1.1754944e-38, %v376
    %v378 = vsel %vm375, %v377, %v373
    %v379 = vrcp.pop %v346
    %v380 = vmul.f32 %v346, %v379
    %v381 = vsub.f32 1.0, %v380
    %v382 = vmul.f32 %v379, %v381
    %v383 = vadd.f32 %v379, %v382
    %vm384 = vweird.f32 %v346
    %vm385 = vweird.f32 %v379
    %vm386 = vmor %vm384, %vm385
    %v387 = vsel %vm386, %v379, %v383
    %v388 = vand.u32 2147483647, %v346
    %vm389 = vcmp.eq.f32.partialorder %v388, 8.507059e+37
    %v390 = vand.u32 %v346, 2147483648
    %v391 = vor.u32 1.1754944e-38, %v390
    %v392 = vsel %vm389, %v391, %v387
    %v393 = vrcp.pop %v349
    %v394 = vmul.f32 %v349, %v393
    %v395 = vsub.f32 1.0, %v394
    %v396 = vmul.f32 %v393, %v395
    %v397 = vadd.f32 %v393, %v396
    %vm398 = vweird.f32 %v349
    %vm399 = vweird.f32 %v393
    %vm400 = vmor %vm398, %vm399
    %v401 = vsel %vm400, %v393, %v397
    %v402 = vand.u32 2147483647, %v349
    %vm403 = vcmp.eq.f32.partialorder %v402, 8.507059e+37
    %v404 = vand.u32 %v349, 2147483648
    %v405 = vor.u32 1.1754944e-38, %v404
    %v406 = vsel %vm403, %v405, %v401
    %v407 = vrcp.pop %v352
    %v408 = vmul.f32 %v352, %v407
    %v409 = vsub.f32 1.0, %v408
    %v410 = vmul.f32 %v407, %v409
    %v411 = vadd.f32 %v407, %v410
    %vm412 = vweird.f32 %v352
    %vm413 = vweird.f32 %v407
    %vm414 = vmor %vm412, %vm413
    %v415 = vsel %vm414, %v407, %v411
    %v416 = vand.u32 2147483647, %v352
    %vm417 = vcmp.eq.f32.partialorder %v416, 8.507059e+37
    %v418 = vand.u32 %v352, 2147483648
    %v419 = vor.u32 1.1754944e-38, %v418
    %v420 = vsel %vm417, %v419, %v415
    %v421 = vrcp.pop %v355
    %v422 = vmul.f32 %v355, %v421
    %v423 = vsub.f32 1.0, %v422
    %v424 = vmul.f32 %v421, %v423
    %v425 = vadd.f32 %v421, %v424
    %vm426 = vweird.f32 %v355
    %vm427 = vweird.f32 %v421
    %vm428 = vmor %vm426, %vm427
    %v429 = vsel %vm428, %v421, %v425
    %v430 = vand.u32 2147483647, %v355
    %vm431 = vcmp.eq.f32.partialorder %v430, 8.507059e+37
    %v432 = vand.u32 %v355, 2147483648
    %v433 = vor.u32 1.1754944e-38, %v432
    %v434 = vsel %vm431, %v433, %v429
    %v435 = vrcp.pop %v358
    %v436 = vmul.f32 %v358, %v435
    %v437 = vsub.f32 1.0, %v436
    %v438 = vmul.f32 %v435, %v437
    %v439 = vadd.f32 %v435, %v438
    %vm440 = vweird.f32 %v358
    %vm441 = vweird.f32 %v435
    %vm442 = vmor %vm440, %vm441
    %v443 = vsel %vm442, %v435, %v439
    %v444 = vand.u32 2147483647, %v358
    %vm445 = vcmp.eq.f32.partialorder %v444, 8.507059e+37
    %v446 = vand.u32 %v358, 2147483648
    %v447 = vor.u32 1.1754944e-38, %v446
    %v448 = vsel %vm445, %v447, %v443
    %v449 = vrcp.pop %v361
    %v450 = vmul.f32 %v361, %v449
    %v451 = vsub.f32 1.0, %v450
    %v452 = vmul.f32 %v449, %v451
    %v453 = vadd.f32 %v449, %v452
    %vm454 = vweird.f32 %v361
    %vm455 = vweird.f32 %v449
    %vm456 = vmor %vm454, %vm455
    %v457 = vsel %vm456, %v449, %v453
    %v458 = vand.u32 2147483647, %v361
    %vm459 = vcmp.eq.f32.partialorder %v458, 8.507059e+37
    %v460 = vand.u32 %v361, 2147483648
    %v461 = vor.u32 1.1754944e-38, %v460
    %v462 = vsel %vm459, %v461, %v457
    %v463 = vrcp.pop %v364
    %v464 = vmul.f32 %v364, %v463
    %v465 = vsub.f32 1.0, %v464
    %v466 = vmul.f32 %v463, %v465
    %v467 = vadd.f32 %v463, %v466
    %vm468 = vweird.f32 %v364
    %vm469 = vweird.f32 %v463
    %vm470 = vmor %vm468, %vm469
    %v471 = vsel %vm470, %v463, %v467
    %v472 = vand.u32 2147483647, %v364
    %vm473 = vcmp.eq.f32.partialorder %v472, 8.507059e+37
    %v474 = vand.u32 %v364, 2147483648
    %v475 = vor.u32 1.1754944e-38, %v474
    %v476 = vsel %vm473, %v475, %v471
    %v477 = vmul.f32 %v326, %v378
    %v478 = vmul.f32 %v328, %v392
    %v479 = vmul.f32 %v330, %v406
    %v480 = vmul.f32 %v332, %v420
    %v481 = vmul.f32 %v334, %v434
    %v482 = vmul.f32 %v336, %v448
    %v483 = vmul.f32 %v338, %v462
    %v484 = vmul.f32 %v340, %v476
    %485 = vrot.lane.b32.xlu0 %v175, 64
    %v486 = vpop.permute.xlu0 %485
    %487 = vrot.lane.b32.xlu0 %v178, 64
    %v488 = vpop.permute.xlu0 %487
    %489 = vrot.lane.b32.xlu0 %v183, 64
    %v490 = vpop.permute.xlu0 %489
    %491 = vrot.lane.b32.xlu0 %v185, 64
    %v492 = vpop.permute.xlu0 %491
    %493 = vrot.lane.b32.xlu0 %v187, 64
    %v494 = vpop.permute.xlu0 %493
    %495 = vrot.lane.b32.xlu0 %v189, 64
    %v496 = vpop.permute.xlu0 %495
    %497 = vrot.lane.b32.xlu0 %v191, 64
    %v498 = vpop.permute.xlu0 %497
    %499 = vrot.lane.b32.xlu0 %v193, 64
    %v500 = vpop.permute.xlu0 %499
    %v510 = vsel %vm292, %v477, 0
    %v513 = vsel %vm292, %v478, 0
    %v516 = vsel %vm292, %v479, 0
    %v519 = vsel %vm292, %v480, 0
    %v522 = vsel %vm292, %v481, 0
    %v525 = vsel %vm292, %v482, 0
    %v528 = vsel %vm292, %v483, 0
    %v531 = vsel %vm292, %v484, 0
    %533 = vmatpush.msra.mxu0 0.0
    %534 = vmatpush.msra.mxu0 0.0
    %535 = vmatpush.msra.mxu0 0.0
    %536 = vmatpush.msra.mxu0 0.0
    %537 = vmatpush.msra.mxu0 0.0
    %538 = vmatpush.msra.mxu0 0.0
    %539 = vmatpush.msra.mxu0 0.0
    %540 = vmatpush.msra.mxu0 0.0
    %541 = vmatpush.msra.mxu0 %v500
    %542 = vmatpush.msra.mxu0 %v498
    %543 = vmatpush.msra.mxu0 %v496
    %544 = vmatpush.msra.mxu0 %v494
    %545 = vmatpush.msra.mxu0 %v492
    %546 = vmatpush.msra.mxu0 %v490
    %547 = vmatpush.msra.mxu0 %v488
    %548 = vmatpush.msra.mxu0 %v486
    %549 = vmatmul.f32.gmra.mxu0 %v510
    %v550 = vpop.f32.mrf.mxu0
    %v551 = vadd.f32 0.0, %v550
    %552 = vmatmul.f32.gmra.mxu0 %v513
    %v553 = vpop.f32.mrf.mxu0
    %v554 = vadd.f32 0.0, %v553
    %555 = vmatmul.f32.gmra.mxu0 %v516
    %v556 = vpop.f32.mrf.mxu0
    %v557 = vadd.f32 0.0, %v556
    %558 = vmatmul.f32.gmra.mxu0 %v519
    %v559 = vpop.f32.mrf.mxu0
    %v560 = vadd.f32 0.0, %v559
    %561 = vmatmul.f32.gmra.mxu0 %v522
    %v562 = vpop.f32.mrf.mxu0
    %v563 = vadd.f32 0.0, %v562
    %564 = vmatmul.f32.gmra.mxu0 %v525
    %v565 = vpop.f32.mrf.mxu0
    %v566 = vadd.f32 0.0, %v565
    %567 = vmatmul.f32.gmra.mxu0 %v528
    %v568 = vpop.f32.mrf.mxu0
    %v569 = vadd.f32 0.0, %v568
    %570 = vmatmul.f32.gmra.mxu0 %v531
    %v571 = vpop.f32.mrf.mxu0
    %v572 = vadd.f32 0.0, %v571
    %573 = vdwg.mxu0
    %576 = vrot.lane.b32.xlu0 %v557, 8
    %v577 = vpop.permute.xlu0 %576
    %578 = vrot.lane.b32.xlu0 %v560, 8
    %v579 = vpop.permute.xlu0 %578
    %584 = vrot.lane.b32.xlu0 %v563, 16
    %v585 = vpop.permute.xlu0 %584
    %586 = vrot.lane.b32.xlu0 %v566, 16
    %v587 = vpop.permute.xlu0 %586
    %592 = vrot.lane.b32.xlu0 %v569, 24
    %v593 = vpop.permute.xlu0 %592
    %594 = vrot.lane.b32.xlu0 %v572, 24
    %v595 = vpop.permute.xlu0 %594
    %v598 = vsel %vm218, %v551, %v577
    %v599 = vsel %vm218, %v554, %v579
    %vm600 = vcmask 130048
    %v601 = vsel %vm600, %v598, %v585
    %v602 = vsel %vm600, %v599, %v587
    %vm603 = vcmask 195584
    %v604 = vsel %vm603, %v601, %v593
    %v605 = vsel %vm603, %v602, %v595
    %v606 = vld [vmem:[#allocation8] sm:$0xff]
    %v607 = vld [vmem:[#allocation8 + $0x8] sm:$0xff]
    %v608 = vld [vmem:[#allocation8 + $0x10] sm:$0xff]
    %v609 = vld [vmem:[#allocation8 + $0x18] sm:$0xff]
    %v611 = vsel %vm101, %v604, 0
    %v614 = vsel %vm101, %v605, 0
    %616 = vmatpush.msra.mxu0 0.0
    %617 = vmatpush.msra.mxu0 0.0
    %618 = vmatpush.msra.mxu0 0.0
    %619 = vmatpush.msra.mxu0 0.0
    %620 = vmatpush.msra.mxu0 0.0
    %621 = vmatpush.msra.mxu0 0.0
    %622 = vmatpush.msra.mxu0 0.0
    %623 = vmatpush.msra.mxu0 0.0
    %624 = vmatpush.msra.mxu0 0.0
    %625 = vmatpush.msra.mxu0 0.0
    %626 = vmatpush.msra.mxu0 0.0
    %627 = vmatpush.msra.mxu0 0.0
    %628 = vmatpush.msra.mxu0 %v609
    %629 = vmatpush.msra.mxu0 %v608
    %630 = vmatpush.msra.mxu0 %v607
    %631 = vmatpush.msra.mxu0 %v606
    %632 = vmatmul.f32.gmra.mxu0 %v611
    %v633 = vpop.f32.mrf.mxu0
    %v634 = vadd.f32 0.0, %v633
    %635 = vmatmul.f32.gmra.mxu0 %v614
    %v636 = vpop.f32.mrf.mxu0
    %v637 = vadd.f32 0.0, %v636
    %638 = vdwg.mxu0
    %v639 = vadd.f32 %v97, %v634
    %v640 = vadd.f32 %v98, %v637
    %641 = vst.msk [vmem:[#allocation11] sm:$0xff] %vm101, %v639
    %642 = vst.msk [vmem:[#allocation11 + $0x8] sm:$0xff] %vm101, %v640
    // Predicated region
    $region42: #{tpu_custom_call.1} parent=1 // pred_check
      _
    $region43: #{tpu_custom_call.1} parent=1 // pred_check_branch
      %644 = sbr.rel (0) target = $region45
    $region44: #{tpu_custom_call.1} parent=1 // pred_region
      %646 = vsyncadd [#allocation4], 0
      %s647 = sshll.u32 [#allocation11], 4
      %s648 = int_to_ptr.vmem [resolvable:$true] %s647
      %s649 = sshll.u32 %s5, 4
      %s650 = int_to_ptr.hbm [resolvable:$true] %s649
      %655 = dma.vmem_to_hbm [thread:$0]  %s648, 256, %s650, [#allocation4], 128, 128, 8
    $region45: #{tpu_custom_call.1} parent=1 // pred_fallthru
      _
    // Predicated region
    $region46: #{tpu_custom_call.1} parent=1 // pred_check
      _
    $region47: #{tpu_custom_call.1} parent=1 // pred_check_branch
      %657 = sbr.rel (0) target = $region49
    $region48: #{tpu_custom_call.1} parent=1 // pred_region
      %659 = dma.done [#allocation4], 256
    $region49: #{tpu_custom_call.1} parent=1 // pred_fallthru
      _
    %660 = vsyncpa [#allocation3], 1
    %661 = vsyncpa [#allocation6], 1
    %662 = vsyncpa [#allocation9], 1
    %663 = vsyncpa [#allocation4], 1

</llo_original>
